<compile_context>
chip_gen: v6e
topology: v6e:2x2x1
jax: 0.10.0
libtpu: 0.0.40
codegen_flags: <defaults>
</compile_context>

<pallas_src>
import jax
import jax.numpy as jnp
from jax.experimental import pallas as pl
from jax.experimental.pallas import tpu as pltpu

_TM_MAX = 2048                    # lane-dim tile over the flattened pixel axis
_VMEM_LIMIT = 32 * 1024 * 1024    # tiles here are <1 MiB; plenty of headroom


def _round_up(x, m):
    return ((x + m - 1) // m) * m


def _conv_stats_kernel(p_ref, w_ref, st_ref):
    # p_ref: (Cctr, tm) bf16, w_ref: (Cout, Cctr) bf16, st_ref: (Cout, 2) f32
    acc = jnp.dot(w_ref[...], p_ref[...], preferred_element_type=jnp.float32)
    st_ref[:, 0:1] = jnp.sum(acc, axis=1, keepdims=True)
    st_ref[:, 1:2] = jnp.sum(acc * acc, axis=1, keepdims=True)


def _conv_bn_relu_kernel(p_ref, w_ref, scale_ref, shift_ref, o_ref):
    # One fused MXU matmul (f32 accumulation) + folded BN affine + ReLU.
    acc = jnp.dot(w_ref[...], p_ref[...], preferred_element_type=jnp.float32)
    y = acc * scale_ref[...] + shift_ref[...]     # (Cout,1) broadcast over lanes
    o_ref[...] = jnp.maximum(y, 0.0).astype(o_ref.dtype)


def deconv_block_forward(x_nchw, weight_t, gamma, beta, *, stride, padding, eps=1e-5):
    """ConvTranspose2d(bias=False) + BatchNorm2d (train-mode stats) + ReLU."""
    n, cin, h, w = x_nchw.shape
    cin_w, cout, kh, kw = weight_t.shape
    assert cin_w == cin and kh == kw
    k, s, p = kh, stride, padding
    pd = k - 1 - p
    # TODO(synk): only the standard case padding <= kernel-1 is handled here.
    assert pd >= 0
    ho = (h - 1) * s - 2 * p + k
    wo = (w - 1) * s - 2 * p + k

    # Equivalent forward-conv weight: spatial flip, shape (K, K, Cin, Cout).
    w_conv = jnp.transpose(weight_t[:, :, ::-1, ::-1], (2, 3, 0, 1))

    subpixel = s > 1 and k % s == 0 and (2 * p) % s == 0
    if subpixel:
        # Sub-pixel decomposition: per output phase (ry, rx), only taps
        # k' = c + t*s hit real (non-dilation-zero) input samples.
        t = k // s
        qh, qw = ho // s, wo // s
        mp = n * qh * qw
        pada = 2 * t + 1                                 # generous, always in-bounds
        xp = jnp.pad(x_nchw, ((0, 0), (0, 0), (pada, pada), (pada, pada)))
        pats, wts = [], []
        for ry in range(s):
            cy, by = (pd - ry) % s, -((pd - ry) // s)
            for rx in range(s):
                cx, bx = (pd - rx) % s, -((pd - rx) // s)
                taps, tw = [], []
                for ty in range(t):
                    for tx in range(t):
                        iy0, ix0 = pada + by + ty, pada + bx + tx
                        sl = xp[:, :, iy0:iy0 + qh, ix0:ix0 + qw]    # (n,cin,qh,qw)
                        taps.append(jnp.transpose(sl, (1, 0, 2, 3)).reshape(cin, mp))
                        tw.append(w_conv[cy + ty * s, cx + tx * s])  # (cin,cout)
                pats.append(jnp.concatenate(taps, axis=0))           # (Cctr, Mp)
                wts.append(jnp.concatenate(tw, axis=0).T)            # (Cout, Cctr)
        patches = jnp.stack(pats, 0)          # (s*s, Cctr, Mp)
        weights = jnp.stack(wts, 0)           # (s*s, Cout, Cctr)
        nphase, cctr = s * s, t * t * cin
    else:
        # Fallback: dilate + pad, all K*K taps fused into one contraction dim.
        hd, wd = (h - 1) * s + 1, (w - 1) * s + 1
        x_dil = jnp.zeros((n, cin, hd, wd), x_nchw.dtype)
        x_dil = x_dil.at[:, :, ::s, ::s].set(x_nchw)
        xp = jnp.pad(x_dil, ((0, 0), (0, 0), (pd, pd), (pd, pd)))
        mp = n * ho * wo
        taps, tw = [], []
        for ki in range(k):
            for kj in range(k):
                sl = xp[:, :, ki:ki + ho, kj:kj + wo]                 # (n,cin,ho,wo)
                taps.append(jnp.transpose(sl, (1, 0, 2, 3)).reshape(cin, mp))
                tw.append(w_conv[ki, kj])
        patches = jnp.concatenate(taps, axis=0)[None]                 # (1, Cctr, Mp)
        weights = jnp.concatenate(tw, axis=0).T[None]                 # (1, Cout, Cctr)
        nphase, cctr = 1, k * k * cin

    # bf16 MXU operands (f32 accumulation + f32 BN stats inside the kernels).
    patches = patches.astype(jnp.bfloat16)
    weights = weights.astype(jnp.bfloat16)

    # Tile the flattened pixel axis (lane axis): multiples of 128, zero-padded.
    tm = min(_TM_MAX, _round_up(mp, 128))
    mp_pad = _round_up(mp, tm)
    if mp_pad != mp:
        patches = jnp.pad(patches, ((0, 0), (0, 0), (0, mp_pad - mp)))
    n_tiles = mp_pad // tm
    grid = (nphase, n_tiles)

    cparams = pltpu.CompilerParams(
        dimension_semantics=("parallel", "parallel"),
        vmem_limit_bytes=_VMEM_LIMIT,
    )
    p_spec = pl.BlockSpec((None, cctr, tm), lambda ph, i: (ph, 0, i))
    w_spec = pl.BlockSpec((None, cout, cctr), lambda ph, i: (ph, 0, 0))

    # Pass 1: per-tile per-channel (sum, sum-of-squares) partials.
    stats = pl.pallas_call(
        _conv_stats_kernel,
        out_shape=jax.ShapeDtypeStruct((nphase, n_tiles, cout, 2), jnp.float32),
        grid=grid,
        in_specs=[p_spec, w_spec],
        out_specs=pl.BlockSpec((None, None, cout, 2), lambda ph, i: (ph, i, 0, 0)),
        compiler_params=cparams,
    )(patches, weights)

    m_true = float(n * ho * wo)            # zero-padded tile columns add nothing
    total = jnp.sum(stats[..., 0], axis=(0, 1))
    total_sq = jnp.sum(stats[..., 1], axis=(0, 1))
    mean = total / m_true
    var = jnp.maximum(total_sq / m_true - mean * mean, 0.0)   # biased (train mode)
    scale_vec = gamma * jax.lax.rsqrt(var + eps)
    shift_vec = beta - mean * scale_vec
    scale = scale_vec.astype(jnp.float32).reshape(cout, 1)
    shift = shift_vec.astype(jnp.float32).reshape(cout, 1)

    # Pass 2: recompute the cheap mem-bound matmul and fuse BN affine + ReLU
    # (cheaper than writing + re-reading a (Cout, M) f32 intermediate).
    out_t = pl.pallas_call(
        _conv_bn_relu_kernel,
        out_shape=jax.ShapeDtypeStruct((nphase, cout, mp_pad), x_nchw.dtype),
        grid=grid,
        in_specs=[p_spec, w_spec,
                  pl.BlockSpec((cout, 1), lambda ph, i: (0, 0)),
                  pl.BlockSpec((cout, 1), lambda ph, i: (0, 0))],
        out_specs=pl.BlockSpec((None, cout, tm), lambda ph, i: (ph, 0, i)),
        compiler_params=cparams,
    )(patches, weights, scale, shift)

    out_t = out_t[:, :, :mp]
    if subpixel:
        qh, qw = ho // s, wo // s
        out = out_t.reshape(s, s, cout, n, qh, qw)
        out = jnp.transpose(out, (3, 2, 4, 0, 5, 1)).reshape(n, cout, ho, wo)
    else:
        out = jnp.transpose(out_t[0].reshape(cout, n, ho, wo), (1, 0, 2, 3))
    return out


def _reference_forward(x_nchw, weight_t, gamma, beta, *, stride, padding, eps=1e-5):
    # Plain-JAX reference (ConvTranspose2d + train-mode BN + ReLU), with the
    # same bf16 operand rounding as the kernel so tolerances stay tight.
    k = weight_t.shape[-1]
    pd = k - 1 - padding
    xq = x_nchw.astype(jnp.bfloat16).astype(jnp.float32)
    wq = weight_t.astype(jnp.bfloat16).astype(jnp.float32)
    x_nhwc = jnp.transpose(xq, (0, 2, 3, 1))
    w_hwio = jnp.transpose(wq[:, :, ::-1, ::-1], (2, 3, 0, 1))
    y = jax.lax.conv_general_dilated(
        x_nhwc, w_hwio, window_strides=(1, 1),
        padding=[(pd, pd), (pd, pd)], lhs_dilation=(stride, stride),
        dimension_numbers=("NHWC", "HWIO", "NHWC"),
        precision=jax.lax.Precision.HIGHEST)
    mean = jnp.mean(y, axis=(0, 1, 2))
    var = jnp.mean((y - mean) ** 2, axis=(0, 1, 2))
    out = jnp.maximum((y - mean) * jax.lax.rsqrt(var + eps) * gamma + beta, 0.0)
    return jnp.transpose(out, (0, 3, 1, 2))


if __name__ == "__main__":
    # DeconvBlock(inplanes=4, outplanes=8, kernel=4, stride=2, padding=1)
    N, Cin, H, W = 2, 4, 16, 16
    Cout, K, S, P = 8, 4, 2, 1

    key = jax.random.PRNGKey(0)
    kx, kw, kg, kb = jax.random.split(key, 4)
    x = jax.random.normal(kx, (N, Cin, H, W), jnp.float32)
    bound = 1.0 / float((Cin * K * K) ** 0.5)
    weight_t = jax.random.uniform(kw, (Cin, Cout, K, K), jnp.float32, -bound, bound)
    gamma = jax.random.uniform(kg, (Cout,), jnp.float32, 0.5, 1.5)
    beta = 0.1 * jax.random.normal(kb, (Cout,), jnp.float32)

    fwd = jax.jit(lambda a, b, c, d: deconv_block_forward(a, b, c, d, stride=S, padding=P))
    out = fwd(x, weight_t, gamma, beta)
    jax.block_until_ready(out)

    Ho, Wo = (H - 1) * S - 2 * P + K, (W - 1) * S - 2 * P + K
    assert out.shape == (N, Cout, Ho, Wo), out.shape

    ref = _reference_forward(x, weight_t, gamma, beta, stride=S, padding=P)
    err = float(jnp.max(jnp.abs(out - ref)))
    assert err < 2e-2, f"max abs error vs reference too large: {err}"
    print("KERNEL_OK")
</pallas_src>

<mosaic_0001>
module attributes {stable_mosaic.version = 11 : i64} {
  func.func @_conv_stats_kernel(%arg0: i32, %arg1: i32, %arg2: memref<1x16x512xbf16, #tpu.memory_space<vmem>>, %arg3: memref<1x8x16xbf16, #tpu.memory_space<vmem>>, %arg4: memref<1x1x8x2xf32, #tpu.memory_space<vmem>>) attributes {dimension_semantics = [#tpu.dimension_semantics<parallel>, #tpu.dimension_semantics<parallel>], iteration_bounds = array<i64: 4, 1>, scalar_prefetch = 0 : i64, scratch_operands = 0 : i64, tpu.core_type = #tpu.core_type<tc>, window_params = [{transform_indices = @transform_0, window_bounds = array<i64: 1, 16, 512>}, {transform_indices = @transform_1, window_bounds = array<i64: 1, 8, 16>}, {transform_indices = @transform_2, window_bounds = array<i64: 1, 1, 8, 2>}]} {
    %c0 = arith.constant 0 : index
    %c0_0 = arith.constant 0 : index
    %c0_1 = arith.constant 0 : index
    %0 = vector.load %arg3[%c0, %c0_0, %c0_1] : memref<1x8x16xbf16, #tpu.memory_space<vmem>>, vector<1x8x16xbf16>
    %1 = vector.shape_cast %0 : vector<1x8x16xbf16> to vector<8x16xbf16>
    %c0_2 = arith.constant 0 : index
    %c0_3 = arith.constant 0 : index
    %c0_4 = arith.constant 0 : index
    %2 = vector.load %arg2[%c0_2, %c0_3, %c0_4] : memref<1x16x512xbf16, #tpu.memory_space<vmem>>, vector<1x16x512xbf16>
    %3 = vector.shape_cast %2 : vector<1x16x512xbf16> to vector<16x512xbf16>
    %cst = arith.constant dense<0.000000e+00> : vector<8x512xf32>
    %4 = tpu.matmul %1, %3, %cst {dimension_numbers = #tpu.dot_dimension_numbers<[1], [0], [0], [1], [0, 0, 1, 1], [], []>} : vector<8x16xbf16>, vector<16x512xbf16>, vector<8x512xf32> -> vector<8x512xf32>
    %cst_5 = arith.constant dense<0.000000e+00> : vector<8xf32>
    %5 = vector.multi_reduction <add>, %4, %cst_5 [1] : vector<8x512xf32> to vector<8xf32>
    %6 = vector.shape_cast %5 : vector<8xf32> to vector<8x1xf32>
    %c0_6 = arith.constant 0 : index
    %c0_7 = arith.constant 0 : index
    %c0_8 = arith.constant 0 : index
    %c0_9 = arith.constant 0 : index
    %7 = vector.load %arg4[%c0_6, %c0_7, %c0_8, %c0_9] : memref<1x1x8x2xf32, #tpu.memory_space<vmem>>, vector<1x1x8x1xf32>
    %8 = vector.shape_cast %7 : vector<1x1x8x1xf32> to vector<8x1xf32>
    %9 = vector.shape_cast %6 : vector<8x1xf32> to vector<1x1x8x1xf32>
    tpu.vector_store %arg4[%c0_6, %c0_7, %c0_8, %c0_9], %9 {strides = array<i32>} : memref<1x1x8x2xf32, #tpu.memory_space<vmem>>, vector<1x1x8x1xf32>,
    %10 = arith.mulf %4, %4 : vector<8x512xf32>
    %cst_10 = arith.constant dense<0.000000e+00> : vector<8xf32>
    %11 = vector.multi_reduction <add>, %10, %cst_10 [1] : vector<8x512xf32> to vector<8xf32>
    %12 = vector.shape_cast %11 : vector<8xf32> to vector<8x1xf32>
    %c0_11 = arith.constant 0 : index
    %c0_12 = arith.constant 0 : index
    %c0_13 = arith.constant 0 : index
    %c1 = arith.constant 1 : index
    %13 = vector.load %arg4[%c0_11, %c0_12, %c0_13, %c1] : memref<1x1x8x2xf32, #tpu.memory_space<vmem>>, vector<1x1x8x1xf32>
    %14 = vector.shape_cast %13 : vector<1x1x8x1xf32> to vector<8x1xf32>
    %15 = vector.shape_cast %12 : vector<8x1xf32> to vector<1x1x8x1xf32>
    tpu.vector_store %arg4[%c0_11, %c0_12, %c0_13, %c1], %15 {strides = array<i32>} : memref<1x1x8x2xf32, #tpu.memory_space<vmem>>, vector<1x1x8x1xf32>,
    return
  }
  func.func @transform_0(%arg0: i32, %arg1: i32) -> (i32, i32, i32) {
    %c0_i32 = arith.constant 0 : i32
    %c0_i32_0 = arith.constant 0 : i32
    return %arg0, %c0_i32, %arg1 : i32, i32, i32
  }
  func.func @transform_1(%arg0: i32, %arg1: i32) -> (i32, i32, i32) {
    %c0_i32 = arith.constant 0 : i32
    %c0_i32_0 = arith.constant 0 : i32
    %c0_i32_1 = arith.constant 0 : i32
    return %arg0, %c0_i32, %c0_i32_0 : i32, i32, i32
  }
  func.func @transform_2(%arg0: i32, %arg1: i32) -> (i32, i32, i32, i32) {
    %c0_i32 = arith.constant 0 : i32
    %c0_i32_0 = arith.constant 0 : i32
    %c0_i32_1 = arith.constant 0 : i32
    return %arg0, %arg1, %c0_i32, %c0_i32_0 : i32, i32, i32, i32
  }
}

module attributes {stable_mosaic.version = 11 : i64} {
  func.func @_conv_bn_relu_kernel(%arg0: i32, %arg1: i32, %arg2: memref<1x16x512xbf16, #tpu.memory_space<vmem>>, %arg3: memref<1x8x16xbf16, #tpu.memory_space<vmem>>, %arg4: memref<8x1xf32, #tpu.memory_space<vmem>>, %arg5: memref<8x1xf32, #tpu.memory_space<vmem>>, %arg6: memref<1x8x512xf32, #tpu.memory_space<vmem>>) attributes {dimension_semantics = [#tpu.dimension_semantics<parallel>, #tpu.dimension_semantics<parallel>], iteration_bounds = array<i64: 4, 1>, scalar_prefetch = 0 : i64, scratch_operands = 0 : i64, tpu.core_type = #tpu.core_type<tc>, window_params = [{transform_indices = @transform_0, window_bounds = array<i64: 1, 16, 512>}, {transform_indices = @transform_1, window_bounds = array<i64: 1, 8, 16>}, {pipeline_mode = #tpu.pipeline_mode<synchronous>, transform_indices = @transform_2, window_bounds = array<i64: 8, 1>}, {pipeline_mode = #tpu.pipeline_mode<synchronous>, transform_indices = @transform_3, window_bounds = array<i64: 8, 1>}, {transform_indices = @transform_4, window_bounds = array<i64: 1, 8, 512>}]} {
    %c0 = arith.constant 0 : index
    %c0_0 = arith.constant 0 : index
    %c0_1 = arith.constant 0 : index
    %0 = vector.load %arg3[%c0, %c0_0, %c0_1] : memref<1x8x16xbf16, #tpu.memory_space<vmem>>, vector<1x8x16xbf16>
    %1 = vector.shape_cast %0 : vector<1x8x16xbf16> to vector<8x16xbf16>
    %c0_2 = arith.constant 0 : index
    %c0_3 = arith.constant 0 : index
    %c0_4 = arith.constant 0 : index
    %2 = vector.load %arg2[%c0_2, %c0_3, %c0_4] : memref<1x16x512xbf16, #tpu.memory_space<vmem>>, vector<1x16x512xbf16>
    %3 = vector.shape_cast %2 : vector<1x16x512xbf16> to vector<16x512xbf16>
    %cst = arith.constant dense<0.000000e+00> : vector<8x512xf32>
    %4 = tpu.matmul %1, %3, %cst {dimension_numbers = #tpu.dot_dimension_numbers<[1], [0], [0], [1], [0, 0, 1, 1], [], []>} : vector<8x16xbf16>, vector<16x512xbf16>, vector<8x512xf32> -> vector<8x512xf32>
    %c0_5 = arith.constant 0 : index
    %c0_6 = arith.constant 0 : index
    %5 = vector.load %arg4[%c0_5, %c0_6] : memref<8x1xf32, #tpu.memory_space<vmem>>, vector<8x1xf32>
    %6 = vector.broadcast %5 : vector<8x1xf32> to vector<8x512xf32>
    %7 = arith.mulf %4, %6 : vector<8x512xf32>
    %c0_7 = arith.constant 0 : index
    %c0_8 = arith.constant 0 : index
    %8 = vector.load %arg5[%c0_7, %c0_8] : memref<8x1xf32, #tpu.memory_space<vmem>>, vector<8x1xf32>
    %9 = vector.broadcast %8 : vector<8x1xf32> to vector<8x512xf32>
    %10 = arith.addf %7, %9 : vector<8x512xf32>
    %cst_9 = arith.constant 0.000000e+00 : f32
    %11 = vector.broadcast %cst_9 : f32 to vector<8x512xf32>
    %12 = arith.maximumf %10, %11 : vector<8x512xf32>
    %c0_10 = arith.constant 0 : index
    %c0_11 = arith.constant 0 : index
    %c0_12 = arith.constant 0 : index
    %13 = vector.load %arg6[%c0_10, %c0_11, %c0_12] : memref<1x8x512xf32, #tpu.memory_space<vmem>>, vector<1x8x512xf32>
    %14 = vector.shape_cast %13 : vector<1x8x512xf32> to vector<8x512xf32>
    %15 = vector.shape_cast %12 : vector<8x512xf32> to vector<1x8x512xf32>
    tpu.vector_store %arg6[%c0_10, %c0_11, %c0_12], %15 {strides = array<i32>} : memref<1x8x512xf32, #tpu.memory_space<vmem>>, vector<1x8x512xf32>,
    return
  }
  func.func @transform_0(%arg0: i32, %arg1: i32) -> (i32, i32, i32) {
    %c0_i32 = arith.constant 0 : i32
    %c0_i32_0 = arith.constant 0 : i32
    return %arg0, %c0_i32, %arg1 : i32, i32, i32
  }
  func.func @transform_1(%arg0: i32, %arg1: i32) -> (i32, i32, i32) {
    %c0_i32 = arith.constant 0 : i32
    %c0_i32_0 = arith.constant 0 : i32
    %c0_i32_1 = arith.constant 0 : i32
    return %arg0, %c0_i32, %c0_i32_0 : i32, i32, i32
  }
  func.func @transform_2(%arg0: i32, %arg1: i32) -> (i32, i32) {
    %c0_i32 = arith.constant 0 : i32
    %c0_i32_0 = arith.constant 0 : i32
    %c0_i32_1 = arith.constant 0 : i32
    return %c0_i32, %c0_i32_0 : i32, i32
  }
  func.func @transform_3(%arg0: i32, %arg1: i32) -> (i32, i32) {
    %c0_i32 = arith.constant 0 : i32
    %c0_i32_0 = arith.constant 0 : i32
    %c0_i32_1 = arith.constant 0 : i32
    return %c0_i32, %c0_i32_0 : i32, i32
  }
  func.func @transform_4(%arg0: i32, %arg1: i32) -> (i32, i32, i32) {
    %c0_i32 = arith.constant 0 : i32
    %c0_i32_0 = arith.constant 0 : i32
    return %arg0, %c0_i32, %arg1 : i32, i32, i32
  }
}

</mosaic_0001>

<llo_original>
// kernel: _lambda_.3
$region0: #{_lambda_.3}
  #allocation0 [shape = 'u32[]', space=smem, size = 0x4, offset = 0x4, fixed_abs, tag = 'smem constant byte address 0x4 - core index']
  #allocation1 [shape = 'u32[144,128]{1,0:T(1,128)}', space=vmem, size = 0x12000, scoped, tag = 'internal scratch']
  %s0 = inlined_call_operand.vmem [shape: bf16[4,16,512], index: 0, kind: input, shape index: {}]
  %s1 = inlined_call_operand.vmem [shape: bf16[4,8,16], index: 1, kind: input, shape index: {}]
  %s2 = inlined_call_operand.vmem [shape: f32[8,1], index: 2, kind: input, shape index: {}]
  %s3 = inlined_call_operand.vmem [shape: f32[8,1], index: 3, kind: input, shape index: {}]
  %s4 = inlined_call_operand.vmem [shape: f32[4,8,512], index: 4, kind: output, shape index: {}]
  %s5 = sld [smem:[#allocation0]]
  $region49: #{_lambda_.3} parent=0
    _
  %s7 = ssub.s32 1, %s5
  %s8 = scalar_select 0, %s7, %s5
  loop: start=0, step=1, limit=6
  $region2: #{_lambda_.3} parent=0 // loop_pre_header
    _
  $region3: #{_lambda_.3} parent=0 // loop_header
    %s10 = sphi 0, %s14
    %p11 = scmp.ge.s32.totalorder %s10, 6
    %s17 = sphi 0, %s29
    %s18 = sphi 0, %s25
    %s19 = sphi 0, %s17
    %s20 = sphi 0, %s18
    %s21 = sphi 0, %s19
    %s22 = sphi 0, %s20
    %s34 = sphi 0, %s36
    %s37 = sphi 0, %s34
    %s38 = sphi 0, %s37
    %s54 = sphi 0, %s38
    %s60 = sphi 0, %s62
    %s63 = sphi 0, %s60
    %s64 = sphi 0, %s63
    %s80 = sphi 0, %s64
    %s84 = sphi 0, %s84
    %s86 = sphi 0, %s84
    %s87 = sphi 0, %s86
    %s101 = sphi 0, %s87
    %s105 = sphi 0, %s105
    %s107 = sphi 0, %s105
    %s108 = sphi 0, %s107
    %s122 = sphi 0, %s108
    %s130 = sphi 0, %s132
    %s133 = sphi 0, %s130
    %s134 = sphi 0, %s133
    %s150 = sphi 0, %s134
  $region4: #{_lambda_.3} parent=0 // loop_header_branch
    %13 = sbr.rel (%p11) target = $region8
  $region5: #{_lambda_.3} parent=0 // loop_body
    %s15 = ssub.s32 %s10, 1
    %s16 = ssub.s32 %s10, 2
    %s23 = sadd.s32 1, %s18
    %p24 = scmp.ge.s32.totalorder %s23, 1
    %s25 = scalar_select %p24, 0, %s23
    %s26 = sadd.s32 1, %s17
    %s27 = scalar_select %p24, %s26, %s17
    %p28 = scmp.ge.s32.totalorder %s27, 4
    %s29 = scalar_select %p28, 0, %s27
    %s30 = ssub.s32 %s17, %s29
    %s31 = ssub.s32 %s18, %s25
    %s32 = sor.u32 %s30, %s31
    %p33 = scmp.eq.s32.totalorder %s32, 0
    %s35 = sadd.s32 %s34, 1
    %s36 = scalar_select %p33, %s34, %s35
    %p39 = pneg %p33
    %p40 = scmp.eq.s32.totalorder %s10, 3
    %p41 = por %p39, %p40
    %p42 = scmp.ne.s32.totalorder %s34, %s37
    %p43 = scmp.eq.s32.totalorder %s10, 0
    %p44 = por %p42, %p43
    %p45 = scmp.ne.s32.totalorder %s34, %s37
    %p46 = scmp.eq.s32.totalorder %s15, 3
    %p47 = por %p45, %p46
    %p48 = scmp.ne.s32.totalorder %s37, %s38
    %p49 = scmp.eq.s32.totalorder %s15, 0
    %p50 = por %p48, %p49
    %p51 = scmp.ne.s32.totalorder %s37, %s38
    %p52 = scmp.eq.s32.totalorder %s16, 3
    %p53 = por %p51, %p52
    %p55 = scmp.ne.s32.totalorder %s38, %s54
    %p56 = scmp.eq.s32.totalorder %s16, 0
    %p57 = por %p55, %p56
    %s58 = ssub.s32 %s17, %s29
    %p59 = scmp.eq.s32.totalorder %s58, 0
    %s61 = sadd.s32 %s60, 1
    %s62 = scalar_select %p59, %s60, %s61
    %p65 = pneg %p59
    %p66 = scmp.eq.s32.totalorder %s10, 3
    %p67 = por %p65, %p66
    %p68 = scmp.ne.s32.totalorder %s60, %s63
    %p69 = scmp.eq.s32.totalorder %s10, 0
    %p70 = por %p68, %p69
    %p71 = scmp.ne.s32.totalorder %s60, %s63
    %p72 = scmp.eq.s32.totalorder %s15, 3
    %p73 = por %p71, %p72
    %p74 = scmp.ne.s32.totalorder %s63, %s64
    %p75 = scmp.eq.s32.totalorder %s15, 0
    %p76 = por %p74, %p75
    %p77 = scmp.ne.s32.totalorder %s63, %s64
    %p78 = scmp.eq.s32.totalorder %s16, 3
    %p79 = por %p77, %p78
    %p81 = scmp.ne.s32.totalorder %s64, %s80
    %p82 = scmp.eq.s32.totalorder %s16, 0
    %p83 = por %p81, %p82
    %s85 = sadd.s32 %s84, 1
    %p88 = scmp.eq.s32.totalorder %s10, 3
    %p89 = scmp.ne.s32.totalorder %s84, %s86
    %p90 = scmp.eq.s32.totalorder %s10, 0
    %p91 = por %p89, %p90
    %p92 = scmp.ne.s32.totalorder %s84, %s86
    %p93 = scmp.eq.s32.totalorder %s15, 3
    %p94 = por %p92, %p93
    %p95 = scmp.ne.s32.totalorder %s86, %s87
    %p96 = scmp.eq.s32.totalorder %s15, 0
    %p97 = por %p95, %p96
    %p98 = scmp.ne.s32.totalorder %s86, %s87
    %p99 = scmp.eq.s32.totalorder %s16, 3
    %p100 = por %p98, %p99
    %p102 = scmp.ne.s32.totalorder %s87, %s101
    %p103 = scmp.eq.s32.totalorder %s16, 0
    %p104 = por %p102, %p103
    %s106 = sadd.s32 %s105, 1
    %p109 = scmp.eq.s32.totalorder %s10, 3
    %p110 = scmp.ne.s32.totalorder %s105, %s107
    %p111 = scmp.eq.s32.totalorder %s10, 0
    %p112 = por %p110, %p111
    %p113 = scmp.ne.s32.totalorder %s105, %s107
    %p114 = scmp.eq.s32.totalorder %s15, 3
    %p115 = por %p113, %p114
    %p116 = scmp.ne.s32.totalorder %s107, %s108
    %p117 = scmp.eq.s32.totalorder %s15, 0
    %p118 = por %p116, %p117
    %p119 = scmp.ne.s32.totalorder %s107, %s108
    %p120 = scmp.eq.s32.totalorder %s16, 3
    %p121 = por %p119, %p120
    %p123 = scmp.ne.s32.totalorder %s108, %s122
    %p124 = scmp.eq.s32.totalorder %s16, 0
    %p125 = por %p123, %p124
    %s126 = ssub.s32 %s17, %s29
    %s127 = ssub.s32 %s18, %s25
    %s128 = sor.u32 %s126, %s127
    %p129 = scmp.eq.s32.totalorder %s128, 0
    %s131 = sadd.s32 %s130, 1
    %s132 = scalar_select %p129, %s130, %s131
    %p135 = pneg %p129
    %p136 = scmp.eq.s32.totalorder %s10, 3
    %p137 = por %p135, %p136
    %p138 = scmp.ne.s32.totalorder %s130, %s133
    %p139 = scmp.eq.s32.totalorder %s10, 0
    %p140 = por %p138, %p139
    %p141 = scmp.ne.s32.totalorder %s130, %s133
    %p142 = scmp.eq.s32.totalorder %s15, 3
    %p143 = por %p141, %p142
    %p144 = scmp.ne.s32.totalorder %s133, %s134
    %p145 = scmp.eq.s32.totalorder %s15, 0
    %p146 = por %p144, %p145
    %p147 = scmp.ne.s32.totalorder %s133, %s134
    %p148 = scmp.eq.s32.totalorder %s16, 3
    %p149 = por %p147, %p148
    %p151 = scmp.ne.s32.totalorder %s134, %s150
    %p152 = scmp.eq.s32.totalorder %s16, 0
    %p153 = por %p151, %p152
    %p154 = scmp.le.s32.totalorder 1, %s10
    %p155 = scmp.lt.s32.totalorder %s10, 5
    %p156 = pnand %p154, %p155
    %p157 = pneg %p156
    // Predicated region
    $region9: #{_lambda_.3} parent=5 // pred_check
      _
    $region10: #{_lambda_.3} parent=5 // pred_check_branch
      %159 = sbr.rel (%p156) target = $region12
    $region11: #{_lambda_.3} parent=5 // pred_region
      %s160 = ssub.s32 %s10, 1
      // Predicated region
      $region13: #{_lambda_.3} parent=11 // pred_check
        %p161 = pneg %p97
      $region14: #{_lambda_.3} parent=11 // pred_check_branch
        %163 = sbr.rel (%p161) target = $region16
      $region15: #{_lambda_.3} parent=11 // pred_region
        _
      $region16: #{_lambda_.3} parent=11 // pred_fallthru
        _
      // Predicated region
      $region17: #{_lambda_.3} parent=11 // pred_check
        %p164 = pneg %p118
      $region18: #{_lambda_.3} parent=11 // pred_check_branch
        %166 = sbr.rel (%p164) target = $region20
      $region19: #{_lambda_.3} parent=11 // pred_region
        _
      $region20: #{_lambda_.3} parent=11 // pred_fallthru
        _
    $region12: #{_lambda_.3} parent=5 // pred_fallthru
      _
    %p167 = scmp.lt.s32.totalorder %s10, 4
    // Predicated region
    $region21: #{_lambda_.3} parent=5 // pred_check
      %p168 = pneg %p167
    $region22: #{_lambda_.3} parent=5 // pred_check_branch
      %170 = sbr.rel (%p168) target = $region24
    $region23: #{_lambda_.3} parent=5 // pred_region
      // Predicated region
      $region25: #{_lambda_.3} parent=23 // pred_check
        %p171 = pneg %p44
      $region26: #{_lambda_.3} parent=23 // pred_check_branch
        %173 = sbr.rel (%p171) target = $region28
      $region27: #{_lambda_.3} parent=23 // pred_region
        %s174 = smul.u32 4, %s18
        %p175 = scmp.lt.s32.totalorder %s17, 3
        %s176 = scalar_select %p175, %s17, 3
        %p177 = scmp.lt.s32.totalorder %s174, 3
        %s178 = scalar_select %p177, %s174, 3
        %s179 = smul.addr %s176, 8
        %s180 = sadd.s32 %s178, %s179
        %s181 = smul.addr %s180, 4
        %s182 = scalar_lea.vmem %s0, %s181
        %s183 = smul.u32 4, %s18
      $region28: #{_lambda_.3} parent=23 // pred_fallthru
        _
      // Predicated region
      $region29: #{_lambda_.3} parent=23 // pred_check
        %p184 = pneg %p70
      $region30: #{_lambda_.3} parent=23 // pred_check_branch
        %186 = sbr.rel (%p184) target = $region32
      $region31: #{_lambda_.3} parent=23 // pred_region
        %p187 = scmp.lt.s32.totalorder %s17, 3
        %s188 = scalar_select %p187, %s17, 3
        %s189 = smul.addr %s188, 4
        %s190 = scalar_lea.vmem %s1, %s189
      $region32: #{_lambda_.3} parent=23 // pred_fallthru
        _
    $region24: #{_lambda_.3} parent=5 // pred_fallthru
      _
    %p191 = scmp.le.s32.totalorder 1, %s10
    %p192 = scmp.lt.s32.totalorder %s10, 5
    %p193 = pnand %p191, %p192
    %p194 = pneg %p193
    // Predicated region
    $region33: #{_lambda_.3} parent=5 // pred_check
      _
    $region34: #{_lambda_.3} parent=5 // pred_check_branch
      %196 = sbr.rel (%p193) target = $region36
    $region35: #{_lambda_.3} parent=5 // pred_region
      %s197 = ssub.s32 %s10, 1
      %s198 = smul.u32 4, %s20
      %p199 = scmp.lt.s32.totalorder %s19, 3
      %s200 = scalar_select %p199, %s19, 3
      %p201 = scmp.lt.s32.totalorder %s198, 3
      %s202 = scalar_select %p201, %s198, 3
      %s203 = smul.addr %s200, 8
      %s204 = sadd.s32 %s202, %s203
      %s205 = smul.addr %s204, 4
      %s206 = scalar_lea.vmem %s0, %s205
      %p207 = pneg %p50
      %p208 = pneg %p47
      %p209 = scmp.lt.s32.totalorder %s19, 3
      %s210 = scalar_select %p209, %s19, 3
      %s211 = smul.addr %s210, 4
      %s212 = scalar_lea.vmem %s1, %s211
      %p213 = pneg %p76
      %p214 = pneg %p73
      %p215 = pneg %p97
      %p216 = pneg %p94
      %p217 = pneg %p118
      %p218 = pneg %p115
      %p219 = pneg %p146
      %p220 = pneg %p143
      %s221 = smul.u32 4, %s20
      %p222 = scmp.lt.s32.totalorder %s19, 3
      %s223 = scalar_select %p222, %s19, 3
      %p224 = scmp.lt.s32.totalorder %s221, 3
      %s225 = scalar_select %p224, %s221, 3
      %s226 = smul.addr %s223, 4
      %s227 = sadd.s32 %s225, %s226
      %s228 = smul.addr %s227, 8
      %s229 = scalar_lea.vmem %s4, %s228
      %s230 = smul.u32 4, %s20
      %p231 = scmp.lt.s32.totalorder %s19, 3
      %s232 = scalar_select %p231, %s19, 3
      %p233 = scmp.lt.s32.totalorder %s230, 3
      %s234 = scalar_select %p233, %s230, 3
      %s235 = smul.addr %s232, 8
      %s236 = sadd.s32 %s234, %s235
      %s237 = smul.addr %s236, 4
      %s238 = scalar_lea.vmem %s0, %s237
      %s239 = smul.u32 4, %s20
      %p240 = scmp.lt.s32.totalorder %s19, 3
      %s241 = scalar_select %p240, %s19, 3
      %s242 = smul.addr %s241, 4
      %s243 = scalar_lea.vmem %s1, %s242
      %s244 = smul.u32 4, %s20
      %p245 = scmp.lt.s32.totalorder %s19, 3
      %s246 = scalar_select %p245, %s19, 3
      %p247 = scmp.lt.s32.totalorder %s244, 3
      %s248 = scalar_select %p247, %s244, 3
      %s249 = smul.addr %s246, 4
      %s250 = sadd.s32 %s248, %s249
      %s251 = smul.addr %s250, 8
      %s252 = scalar_lea.vmem %s4, %s251
      %s253 = smul.u32 4, %s20
      %v255 = vld [vmem:[%s243] sm:$0xf]
      %v256 = vld [vmem:[%s238] sm:$0xff]
      %v257 = vld [vmem:[%s238 + $0x8] sm:$0xff]
      %v258 = vld [vmem:[%s238 + $0x10] sm:$0xff]
      %v259 = vld [vmem:[%s238 + $0x18] sm:$0xff]
      %v264 = vunpack.c.l.b16 %v256
      %v265 = vunpack.c.h.b16 %v256
      %v266 = vunpack.c.l.b16 %v257
      %v267 = vunpack.c.h.b16 %v257
      %v268 = vunpack.c.l.b16 %v258
      %v269 = vunpack.c.h.b16 %v258
      %v270 = vunpack.c.l.b16 %v259
      %v271 = vunpack.c.h.b16 %v259
      %v272 = vpack.c.b16 %v268, %v264
      %v273 = vpack.c.b16 %v269, %v265
      %v274 = vpack.c.b16 %v270, %v266
      %v275 = vpack.c.b16 %v271, %v267
      %vm280 = vcmask 130048
      %v282 = vsel %vm280, %v255, 0
      %284 = vmatprep.subr.bf16.mxu0 0
      %285 = vmatpush1.bf16.msra.mxu0 0
      %286 = vmatprep.subr.bf16.mxu0 0
      %287 = vmatpush1.bf16.msra.mxu0 0
      %288 = vmatprep.subr.bf16.mxu0 0
      %289 = vmatpush1.bf16.msra.mxu0 0
      %290 = vmatprep.subr.bf16.mxu0 0
      %291 = vmatpush1.bf16.msra.mxu0 0
      %292 = vmatprep.subr.bf16.mxu0 0
      %293 = vmatpush1.bf16.msra.mxu0 0
      %294 = vmatprep.subr.bf16.mxu0 0
      %295 = vmatpush1.bf16.msra.mxu0 0
      %296 = vmatprep.subr.bf16.mxu0 0
      %297 = vmatpush1.bf16.msra.mxu0 0
      %298 = vmatprep.subr.bf16.mxu0 %v273
      %299 = vmatpush1.bf16.msra.mxu0 %v272
      %300 = vmatprep.subr.bf16.mxu0 0
      %301 = vmatpush2.bf16.msra.mxu0 0
      %302 = vmatprep.subr.bf16.mxu0 0
      %303 = vmatpush2.bf16.msra.mxu0 0
      %304 = vmatprep.subr.bf16.mxu0 0
      %305 = vmatpush2.bf16.msra.mxu0 0
      %306 = vmatprep.subr.bf16.mxu0 0
      %307 = vmatpush2.bf16.msra.mxu0 0
      %308 = vmatprep.subr.bf16.mxu0 0
      %309 = vmatpush2.bf16.msra.mxu0 0
      %310 = vmatprep.subr.bf16.mxu0 0
      %311 = vmatpush2.bf16.msra.mxu0 0
      %312 = vmatprep.subr.bf16.mxu0 0
      %313 = vmatpush2.bf16.msra.mxu0 0
      %314 = vmatprep.subr.bf16.mxu0 0
      %315 = vmatpush2.bf16.msra.mxu0 0
      %316 = vmatprep.mubr.bf16.mxu0 0
      %317 = vmatmul.mubr.bf16.gmra.mxu0 %v282
      %v318 = vpop.f32.mrf.mxu0
      %v319 = vadd.f32 0.0, %v318
      %v320 = vpop.f32.mrf.mxu0
      %v321 = vadd.f32 0.0, %v320
      %v322 = vpop.f32.mrf.mxu0
      %v323 = vpop.f32.mrf.mxu0
      %324 = vdwg.mxu0
      %325 = vmatprep.subr.bf16.mxu0 0
      %326 = vmatpush1.bf16.msra.mxu0 0
      %327 = vmatprep.subr.bf16.mxu0 0
      %328 = vmatpush1.bf16.msra.mxu0 0
      %329 = vmatprep.subr.bf16.mxu0 0
      %330 = vmatpush1.bf16.msra.mxu0 0
      %331 = vmatprep.subr.bf16.mxu0 0
      %332 = vmatpush1.bf16.msra.mxu0 0
      %333 = vmatprep.subr.bf16.mxu0 0
      %334 = vmatpush1.bf16.msra.mxu0 0
      %335 = vmatprep.subr.bf16.mxu0 0
      %336 = vmatpush1.bf16.msra.mxu0 0
      %337 = vmatprep.subr.bf16.mxu0 0
      %338 = vmatpush1.bf16.msra.mxu0 0
      %339 = vmatprep.subr.bf16.mxu0 %v275
      %340 = vmatpush1.bf16.msra.mxu0 %v274
      %341 = vmatprep.subr.bf16.mxu0 0
      %342 = vmatpush2.bf16.msra.mxu0 0
      %343 = vmatprep.subr.bf16.mxu0 0
      %344 = vmatpush2.bf16.msra.mxu0 0
      %345 = vmatprep.subr.bf16.mxu0 0
      %346 = vmatpush2.bf16.msra.mxu0 0
      %347 = vmatprep.subr.bf16.mxu0 0
      %348 = vmatpush2.bf16.msra.mxu0 0
      %349 = vmatprep.subr.bf16.mxu0 0
      %350 = vmatpush2.bf16.msra.mxu0 0
      %351 = vmatprep.subr.bf16.mxu0 0
      %352 = vmatpush2.bf16.msra.mxu0 0
      %353 = vmatprep.subr.bf16.mxu0 0
      %354 = vmatpush2.bf16.msra.mxu0 0
      %355 = vmatprep.subr.bf16.mxu0 0
      %356 = vmatpush2.bf16.msra.mxu0 0
      %357 = vmatprep.mubr.bf16.mxu0 0
      %358 = vmatmul.mubr.bf16.gmra.mxu0 %v282
      %v359 = vpop.f32.mrf.mxu0
      %v360 = vadd.f32 0.0, %v359
      %v361 = vpop.f32.mrf.mxu0
      %v362 = vadd.f32 0.0, %v361
      %v363 = vpop.f32.mrf.mxu0
      %v364 = vpop.f32.mrf.mxu0
      %365 = vdwg.mxu0
      %v366 = vld [vmem:[%s2] sm:$0xff]
      %368 = vset.pattern.permute.xlu0 0
      %369 = vperm.xlu0 %368, %v366
      %v370 = vpop.permute.xlu0 %369
      %v372 = vmul.f32 %v319, %v370
      %v373 = vmul.f32 %v321, %v370
      %v374 = vmul.f32 %v360, %v370
      %v375 = vmul.f32 %v362, %v370
      %v376 = vld [vmem:[%s3] sm:$0xff]
      %378 = vset.pattern.permute.xlu0 0
      %379 = vperm.xlu0 %378, %v376
      %v380 = vpop.permute.xlu0 %379
      %v382 = vadd.f32 %v372, %v380
      %v383 = vadd.f32 %v373, %v380
      %v384 = vadd.f32 %v374, %v380
      %v385 = vadd.f32 %v375, %v380
      %v386 = vmax.f32 %v382, 0.0
      %v387 = vmax.f32 %v383, 0.0
      %v388 = vmax.f32 %v384, 0.0
      %v389 = vmax.f32 %v385, 0.0
      %390 = vst [vmem:[%s252] sm:$0xff] %v386
      %391 = vst [vmem:[%s252 + $0x8] sm:$0xff] %v387
      %392 = vst [vmem:[%s252 + $0x10] sm:$0xff] %v388
      %393 = vst [vmem:[%s252 + $0x18] sm:$0xff] %v389
      %s394 = smul.u32 4, %s20
      %p395 = scmp.lt.s32.totalorder %s19, 3
      %s396 = scalar_select %p395, %s19, 3
      %p397 = scmp.lt.s32.totalorder %s394, 3
      %s398 = scalar_select %p397, %s394, 3
      %s399 = smul.addr %s396, 4
      %s400 = sadd.s32 %s398, %s399
      %s401 = smul.addr %s400, 8
      %s402 = scalar_lea.vmem %s4, %s401
      // Predicated region
      $region37: #{_lambda_.3} parent=35 // pred_check
        %p403 = pneg %p143
      $region38: #{_lambda_.3} parent=35 // pred_check_branch
        %405 = sbr.rel (%p403) target = $region40
      $region39: #{_lambda_.3} parent=35 // pred_region
        %s406 = smul.u32 4, %s20
      $region40: #{_lambda_.3} parent=35 // pred_fallthru
        _
    $region36: #{_lambda_.3} parent=5 // pred_fallthru
      _
    %p407 = scmp.le.s32.totalorder 2, %s10
    // Predicated region
    $region41: #{_lambda_.3} parent=5 // pred_check
      %p408 = pneg %p407
    $region42: #{_lambda_.3} parent=5 // pred_check_branch
      %410 = sbr.rel (%p408) target = $region44
    $region43: #{_lambda_.3} parent=5 // pred_region
      %s411 = ssub.s32 %s10, 2
      // Predicated region
      $region45: #{_lambda_.3} parent=43 // pred_check
        %p412 = pneg %p149
      $region46: #{_lambda_.3} parent=43 // pred_check_branch
        %414 = sbr.rel (%p412) target = $region48
      $region47: #{_lambda_.3} parent=43 // pred_region
        %s415 = smul.u32 4, %s22
        %p416 = scmp.lt.s32.totalorder %s21, 3
        %s417 = scalar_select %p416, %s21, 3
        %p418 = scmp.lt.s32.totalorder %s415, 3
        %s419 = scalar_select %p418, %s415, 3
        %s420 = smul.addr %s417, 4
        %s421 = sadd.s32 %s419, %s420
        %s422 = smul.addr %s421, 8
        %s423 = scalar_lea.vmem %s4, %s422
      $region48: #{_lambda_.3} parent=43 // pred_fallthru
        _
    $region44: #{_lambda_.3} parent=5 // pred_fallthru
      _
  $region6: #{_lambda_.3} parent=0 // loop_footer
    %s14 = sadd.s32 1, %s10
  $region7: #{_lambda_.3} parent=0 // loop_footer_branch
    %9 = sbr.rel target = $region3
  $region8: #{_lambda_.3} parent=0 // loop_exit
    _

// kernel: _lambda_.2
$region0: #{_lambda_.2}
  #allocation0 [shape = 'u32[]', space=smem, size = 0x4, offset = 0x4, fixed_abs, tag = 'smem constant byte address 0x4 - core index']
  #allocation1 [shape = 'u32[144,128]{1,0:T(1,128)}', space=vmem, size = 0x12000, scoped, tag = 'internal scratch']
  %s0 = inlined_call_operand.vmem [shape: bf16[4,16,512], index: 0, kind: input, shape index: {}]
  %s1 = inlined_call_operand.vmem [shape: bf16[4,8,16], index: 1, kind: input, shape index: {}]
  %s2 = inlined_call_operand.vmem [shape: f32[4,1,8,2], index: 2, kind: output, shape index: {}]
  %s3 = sld [smem:[#allocation0]]
  $region41: #{_lambda_.2} parent=0
    _
  %s5 = ssub.s32 1, %s3
  %s6 = scalar_select 0, %s5, %s3
  loop: start=0, step=1, limit=6
  $region2: #{_lambda_.2} parent=0 // loop_pre_header
    _
  $region3: #{_lambda_.2} parent=0 // loop_header
    %s8 = sphi 0, %s12
    %p9 = scmp.ge.s32.totalorder %s8, 6
    %s15 = sphi 0, %s27
    %s16 = sphi 0, %s23
    %s17 = sphi 0, %s15
    %s18 = sphi 0, %s16
    %s19 = sphi 0, %s17
    %s20 = sphi 0, %s18
    %s32 = sphi 0, %s34
    %s35 = sphi 0, %s32
    %s36 = sphi 0, %s35
    %s52 = sphi 0, %s36
    %s58 = sphi 0, %s60
    %s61 = sphi 0, %s58
    %s62 = sphi 0, %s61
    %s78 = sphi 0, %s62
    %s86 = sphi 0, %s88
    %s89 = sphi 0, %s86
    %s90 = sphi 0, %s89
    %s106 = sphi 0, %s90
  $region4: #{_lambda_.2} parent=0 // loop_header_branch
    %11 = sbr.rel (%p9) target = $region8
  $region5: #{_lambda_.2} parent=0 // loop_body
    %s13 = ssub.s32 %s8, 1
    %s14 = ssub.s32 %s8, 2
    %s21 = sadd.s32 1, %s16
    %p22 = scmp.ge.s32.totalorder %s21, 1
    %s23 = scalar_select %p22, 0, %s21
    %s24 = sadd.s32 1, %s15
    %s25 = scalar_select %p22, %s24, %s15
    %p26 = scmp.ge.s32.totalorder %s25, 4
    %s27 = scalar_select %p26, 0, %s25
    %s28 = ssub.s32 %s15, %s27
    %s29 = ssub.s32 %s16, %s23
    %s30 = sor.u32 %s28, %s29
    %p31 = scmp.eq.s32.totalorder %s30, 0
    %s33 = sadd.s32 %s32, 1
    %s34 = scalar_select %p31, %s32, %s33
    %p37 = pneg %p31
    %p38 = scmp.eq.s32.totalorder %s8, 3
    %p39 = por %p37, %p38
    %p40 = scmp.ne.s32.totalorder %s32, %s35
    %p41 = scmp.eq.s32.totalorder %s8, 0
    %p42 = por %p40, %p41
    %p43 = scmp.ne.s32.totalorder %s32, %s35
    %p44 = scmp.eq.s32.totalorder %s13, 3
    %p45 = por %p43, %p44
    %p46 = scmp.ne.s32.totalorder %s35, %s36
    %p47 = scmp.eq.s32.totalorder %s13, 0
    %p48 = por %p46, %p47
    %p49 = scmp.ne.s32.totalorder %s35, %s36
    %p50 = scmp.eq.s32.totalorder %s14, 3
    %p51 = por %p49, %p50
    %p53 = scmp.ne.s32.totalorder %s36, %s52
    %p54 = scmp.eq.s32.totalorder %s14, 0
    %p55 = por %p53, %p54
    %s56 = ssub.s32 %s15, %s27
    %p57 = scmp.eq.s32.totalorder %s56, 0
    %s59 = sadd.s32 %s58, 1
    %s60 = scalar_select %p57, %s58, %s59
    %p63 = pneg %p57
    %p64 = scmp.eq.s32.totalorder %s8, 3
    %p65 = por %p63, %p64
    %p66 = scmp.ne.s32.totalorder %s58, %s61
    %p67 = scmp.eq.s32.totalorder %s8, 0
    %p68 = por %p66, %p67
    %p69 = scmp.ne.s32.totalorder %s58, %s61
    %p70 = scmp.eq.s32.totalorder %s13, 3
    %p71 = por %p69, %p70
    %p72 = scmp.ne.s32.totalorder %s61, %s62
    %p73 = scmp.eq.s32.totalorder %s13, 0
    %p74 = por %p72, %p73
    %p75 = scmp.ne.s32.totalorder %s61, %s62
    %p76 = scmp.eq.s32.totalorder %s14, 3
    %p77 = por %p75, %p76
    %p79 = scmp.ne.s32.totalorder %s62, %s78
    %p80 = scmp.eq.s32.totalorder %s14, 0
    %p81 = por %p79, %p80
    %s82 = ssub.s32 %s15, %s27
    %s83 = ssub.s32 %s16, %s23
    %s84 = sor.u32 %s82, %s83
    %p85 = scmp.eq.s32.totalorder %s84, 0
    %s87 = sadd.s32 %s86, 1
    %s88 = scalar_select %p85, %s86, %s87
    %p91 = pneg %p85
    %p92 = scmp.eq.s32.totalorder %s8, 3
    %p93 = por %p91, %p92
    %p94 = scmp.ne.s32.totalorder %s86, %s89
    %p95 = scmp.eq.s32.totalorder %s8, 0
    %p96 = por %p94, %p95
    %p97 = scmp.ne.s32.totalorder %s86, %s89
    %p98 = scmp.eq.s32.totalorder %s13, 3
    %p99 = por %p97, %p98
    %p100 = scmp.ne.s32.totalorder %s89, %s90
    %p101 = scmp.eq.s32.totalorder %s13, 0
    %p102 = por %p100, %p101
    %p103 = scmp.ne.s32.totalorder %s89, %s90
    %p104 = scmp.eq.s32.totalorder %s14, 3
    %p105 = por %p103, %p104
    %p107 = scmp.ne.s32.totalorder %s90, %s106
    %p108 = scmp.eq.s32.totalorder %s14, 0
    %p109 = por %p107, %p108
    %p110 = scmp.le.s32.totalorder 1, %s8
    %p111 = scmp.lt.s32.totalorder %s8, 5
    %p112 = pnand %p110, %p111
    %p113 = pneg %p112
    // Predicated region
    $region9: #{_lambda_.2} parent=5 // pred_check
      _
    $region10: #{_lambda_.2} parent=5 // pred_check_branch
      %115 = sbr.rel (%p112) target = $region12
    $region11: #{_lambda_.2} parent=5 // pred_region
      %s116 = ssub.s32 %s8, 1
    $region12: #{_lambda_.2} parent=5 // pred_fallthru
      _
    %p117 = scmp.lt.s32.totalorder %s8, 4
    // Predicated region
    $region13: #{_lambda_.2} parent=5 // pred_check
      %p118 = pneg %p117
    $region14: #{_lambda_.2} parent=5 // pred_check_branch
      %120 = sbr.rel (%p118) target = $region16
    $region15: #{_lambda_.2} parent=5 // pred_region
      // Predicated region
      $region17: #{_lambda_.2} parent=15 // pred_check
        %p121 = pneg %p42
      $region18: #{_lambda_.2} parent=15 // pred_check_branch
        %123 = sbr.rel (%p121) target = $region20
      $region19: #{_lambda_.2} parent=15 // pred_region
        %s124 = smul.u32 4, %s16
        %p125 = scmp.lt.s32.totalorder %s15, 3
        %s126 = scalar_select %p125, %s15, 3
        %p127 = scmp.lt.s32.totalorder %s124, 3
        %s128 = scalar_select %p127, %s124, 3
        %s129 = smul.addr %s126, 8
        %s130 = sadd.s32 %s128, %s129
        %s131 = smul.addr %s130, 4
        %s132 = scalar_lea.vmem %s0, %s131
        %s133 = smul.u32 4, %s16
      $region20: #{_lambda_.2} parent=15 // pred_fallthru
        _
      // Predicated region
      $region21: #{_lambda_.2} parent=15 // pred_check
        %p134 = pneg %p68
      $region22: #{_lambda_.2} parent=15 // pred_check_branch
        %136 = sbr.rel (%p134) target = $region24
      $region23: #{_lambda_.2} parent=15 // pred_region
        %p137 = scmp.lt.s32.totalorder %s15, 3
        %s138 = scalar_select %p137, %s15, 3
        %s139 = smul.addr %s138, 4
        %s140 = scalar_lea.vmem %s1, %s139
      $region24: #{_lambda_.2} parent=15 // pred_fallthru
        _
    $region16: #{_lambda_.2} parent=5 // pred_fallthru
      _
    %p141 = scmp.le.s32.totalorder 1, %s8
    %p142 = scmp.lt.s32.totalorder %s8, 5
    %p143 = pnand %p141, %p142
    %p144 = pneg %p143
    // Predicated region
    $region25: #{_lambda_.2} parent=5 // pred_check
      _
    $region26: #{_lambda_.2} parent=5 // pred_check_branch
      %146 = sbr.rel (%p143) target = $region28
    $region27: #{_lambda_.2} parent=5 // pred_region
      %s147 = ssub.s32 %s8, 1
      %s148 = smul.u32 4, %s18
      %p149 = scmp.lt.s32.totalorder %s17, 3
      %s150 = scalar_select %p149, %s17, 3
      %p151 = scmp.lt.s32.totalorder %s148, 3
      %s152 = scalar_select %p151, %s148, 3
      %s153 = smul.addr %s150, 8
      %s154 = sadd.s32 %s152, %s153
      %s155 = smul.addr %s154, 4
      %s156 = scalar_lea.vmem %s0, %s155
      %p157 = pneg %p48
      %p158 = pneg %p45
      %p159 = scmp.lt.s32.totalorder %s17, 3
      %s160 = scalar_select %p159, %s17, 3
      %s161 = smul.addr %s160, 4
      %s162 = scalar_lea.vmem %s1, %s161
      %p163 = pneg %p74
      %p164 = pneg %p71
      %p165 = pneg %p102
      %p166 = pneg %p99
      %p167 = scmp.lt.s32.totalorder %s17, 3
      %s168 = scalar_select %p167, %s17, 3
      %p169 = scmp.lt.s32.totalorder %s18, 0
      %s170 = scalar_select %p169, %s18, 0
      %s171 = sadd.s32 %s170, %s168
      %s172 = smul.addr %s171, 8
      %s173 = scalar_lea.vmem %s2, %s172
      %s174 = smul.u32 4, %s18
      %p175 = scmp.lt.s32.totalorder %s17, 3
      %s176 = scalar_select %p175, %s17, 3
      %p177 = scmp.lt.s32.totalorder %s174, 3
      %s178 = scalar_select %p177, %s174, 3
      %s179 = smul.addr %s176, 8
      %s180 = sadd.s32 %s178, %s179
      %s181 = smul.addr %s180, 4
      %s182 = scalar_lea.vmem %s0, %s181
      %s183 = smul.u32 4, %s18
      %p184 = scmp.lt.s32.totalorder %s17, 3
      %s185 = scalar_select %p184, %s17, 3
      %s186 = smul.addr %s185, 4
      %s187 = scalar_lea.vmem %s1, %s186
      %p188 = scmp.lt.s32.totalorder %s17, 3
      %s189 = scalar_select %p188, %s17, 3
      %p190 = scmp.lt.s32.totalorder %s18, 0
      %s191 = scalar_select %p190, %s18, 0
      %s192 = sadd.s32 %s191, %s189
      %s193 = smul.addr %s192, 8
      %s194 = scalar_lea.vmem %s2, %s193
      %v196 = vld [vmem:[%s187] sm:$0xf]
      %v197 = vld [vmem:[%s182] sm:$0xff]
      %v198 = vld [vmem:[%s182 + $0x8] sm:$0xff]
      %v199 = vld [vmem:[%s182 + $0x10] sm:$0xff]
      %v200 = vld [vmem:[%s182 + $0x18] sm:$0xff]
      %v205 = vunpack.c.l.b16 %v197
      %v206 = vunpack.c.h.b16 %v197
      %v207 = vunpack.c.l.b16 %v198
      %v208 = vunpack.c.h.b16 %v198
      %v209 = vunpack.c.l.b16 %v199
      %v210 = vunpack.c.h.b16 %v199
      %v211 = vunpack.c.l.b16 %v200
      %v212 = vunpack.c.h.b16 %v200
      %v213 = vpack.c.b16 %v209, %v205
      %v214 = vpack.c.b16 %v210, %v206
      %v215 = vpack.c.b16 %v211, %v207
      %v216 = vpack.c.b16 %v212, %v208
      %vm221 = vcmask 130048
      %v223 = vsel %vm221, %v196, 0
      %225 = vmatprep.subr.bf16.mxu0 0
      %226 = vmatpush1.bf16.msra.mxu0 0
      %227 = vmatprep.subr.bf16.mxu0 0
      %228 = vmatpush1.bf16.msra.mxu0 0
      %229 = vmatprep.subr.bf16.mxu0 0
      %230 = vmatpush1.bf16.msra.mxu0 0
      %231 = vmatprep.subr.bf16.mxu0 0
      %232 = vmatpush1.bf16.msra.mxu0 0
      %233 = vmatprep.subr.bf16.mxu0 0
      %234 = vmatpush1.bf16.msra.mxu0 0
      %235 = vmatprep.subr.bf16.mxu0 0
      %236 = vmatpush1.bf16.msra.mxu0 0
      %237 = vmatprep.subr.bf16.mxu0 0
      %238 = vmatpush1.bf16.msra.mxu0 0
      %239 = vmatprep.subr.bf16.mxu0 %v214
      %240 = vmatpush1.bf16.msra.mxu0 %v213
      %241 = vmatprep.subr.bf16.mxu0 0
      %242 = vmatpush2.bf16.msra.mxu0 0
      %243 = vmatprep.subr.bf16.mxu0 0
      %244 = vmatpush2.bf16.msra.mxu0 0
      %245 = vmatprep.subr.bf16.mxu0 0
      %246 = vmatpush2.bf16.msra.mxu0 0
      %247 = vmatprep.subr.bf16.mxu0 0
      %248 = vmatpush2.bf16.msra.mxu0 0
      %249 = vmatprep.subr.bf16.mxu0 0
      %250 = vmatpush2.bf16.msra.mxu0 0
      %251 = vmatprep.subr.bf16.mxu0 0
      %252 = vmatpush2.bf16.msra.mxu0 0
      %253 = vmatprep.subr.bf16.mxu0 0
      %254 = vmatpush2.bf16.msra.mxu0 0
      %255 = vmatprep.subr.bf16.mxu0 0
      %256 = vmatpush2.bf16.msra.mxu0 0
      %257 = vmatprep.mubr.bf16.mxu0 0
      %258 = vmatmul.mubr.bf16.gmra.mxu0 %v223
      %v259 = vpop.f32.mrf.mxu0
      %v260 = vadd.f32 0.0, %v259
      %v261 = vpop.f32.mrf.mxu0
      %v262 = vadd.f32 0.0, %v261
      %v263 = vpop.f32.mrf.mxu0
      %v264 = vpop.f32.mrf.mxu0
      %265 = vdwg.mxu0
      %266 = vmatprep.subr.bf16.mxu0 0
      %267 = vmatpush1.bf16.msra.mxu0 0
      %268 = vmatprep.subr.bf16.mxu0 0
      %269 = vmatpush1.bf16.msra.mxu0 0
      %270 = vmatprep.subr.bf16.mxu0 0
      %271 = vmatpush1.bf16.msra.mxu0 0
      %272 = vmatprep.subr.bf16.mxu0 0
      %273 = vmatpush1.bf16.msra.mxu0 0
      %274 = vmatprep.subr.bf16.mxu0 0
      %275 = vmatpush1.bf16.msra.mxu0 0
      %276 = vmatprep.subr.bf16.mxu0 0
      %277 = vmatpush1.bf16.msra.mxu0 0
      %278 = vmatprep.subr.bf16.mxu0 0
      %279 = vmatpush1.bf16.msra.mxu0 0
      %280 = vmatprep.subr.bf16.mxu0 %v216
      %281 = vmatpush1.bf16.msra.mxu0 %v215
      %282 = vmatprep.subr.bf16.mxu0 0
      %283 = vmatpush2.bf16.msra.mxu0 0
      %284 = vmatprep.subr.bf16.mxu0 0
      %285 = vmatpush2.bf16.msra.mxu0 0
      %286 = vmatprep.subr.bf16.mxu0 0
      %287 = vmatpush2.bf16.msra.mxu0 0
      %288 = vmatprep.subr.bf16.mxu0 0
      %289 = vmatpush2.bf16.msra.mxu0 0
      %290 = vmatprep.subr.bf16.mxu0 0
      %291 = vmatpush2.bf16.msra.mxu0 0
      %292 = vmatprep.subr.bf16.mxu0 0
      %293 = vmatpush2.bf16.msra.mxu0 0
      %294 = vmatprep.subr.bf16.mxu0 0
      %295 = vmatpush2.bf16.msra.mxu0 0
      %296 = vmatprep.subr.bf16.mxu0 0
      %297 = vmatpush2.bf16.msra.mxu0 0
      %298 = vmatprep.mubr.bf16.mxu0 0
      %299 = vmatmul.mubr.bf16.gmra.mxu0 %v223
      %v300 = vpop.f32.mrf.mxu0
      %v301 = vadd.f32 0.0, %v300
      %v302 = vpop.f32.mrf.mxu0
      %v303 = vadd.f32 0.0, %v302
      %v304 = vpop.f32.mrf.mxu0
      %v305 = vpop.f32.mrf.mxu0
      %306 = vdwg.mxu0
      %v307 = vadd.f32 %v260, %v262
      %v308 = vadd.f32 %v307, %v301
      %v309 = vadd.f32 %v308, %v303
      %310 = vadd.xlane.f32.xlu0 %v309
      %v311 = vpop.xlane.xlu0 %310
      %vm312 = vcmask 7168
      %313 = vst.msk [vmem:[%s194] sm:$0xff] %vm312, %v311
      %v314 = vmul.f32 %v260, %v260
      %v315 = vmul.f32 %v262, %v262
      %v316 = vmul.f32 %v301, %v301
      %v317 = vmul.f32 %v303, %v303
      %v318 = vadd.f32 %v314, %v315
      %v319 = vadd.f32 %v318, %v316
      %v320 = vadd.f32 %v319, %v317
      %321 = vadd.xlane.f32.xlu0 %v320
      %v322 = vpop.xlane.xlu0 %321
      %vm323 = vcmask 15368
      %324 = vst.msk [vmem:[%s194] sm:$0xff] %vm323, %v322
      %p325 = scmp.lt.s32.totalorder %s17, 3
      %s326 = scalar_select %p325, %s17, 3
      %p327 = scmp.lt.s32.totalorder %s18, 0
      %s328 = scalar_select %p327, %s18, 0
      %s329 = sadd.s32 %s328, %s326
      %s330 = smul.addr %s329, 8
      %s331 = scalar_lea.vmem %s2, %s330
      // Predicated region
      $region29: #{_lambda_.2} parent=27 // pred_check
        %p332 = pneg %p99
      $region30: #{_lambda_.2} parent=27 // pred_check_branch
        %334 = sbr.rel (%p332) target = $region32
      $region31: #{_lambda_.2} parent=27 // pred_region
        _
      $region32: #{_lambda_.2} parent=27 // pred_fallthru
        _
    $region28: #{_lambda_.2} parent=5 // pred_fallthru
      _
    %p335 = scmp.le.s32.totalorder 2, %s8
    // Predicated region
    $region33: #{_lambda_.2} parent=5 // pred_check
      %p336 = pneg %p335
    $region34: #{_lambda_.2} parent=5 // pred_check_branch
      %338 = sbr.rel (%p336) target = $region36
    $region35: #{_lambda_.2} parent=5 // pred_region
      %s339 = ssub.s32 %s8, 2
      // Predicated region
      $region37: #{_lambda_.2} parent=35 // pred_check
        %p340 = pneg %p105
      $region38: #{_lambda_.2} parent=35 // pred_check_branch
        %342 = sbr.rel (%p340) target = $region40
      $region39: #{_lambda_.2} parent=35 // pred_region
        %p343 = scmp.lt.s32.totalorder %s19, 3
        %s344 = scalar_select %p343, %s19, 3
        %p345 = scmp.lt.s32.totalorder %s20, 0
        %s346 = scalar_select %p345, %s20, 0
        %s347 = sadd.s32 %s346, %s344
        %s348 = smul.addr %s347, 8
        %s349 = scalar_lea.vmem %s2, %s348
      $region40: #{_lambda_.2} parent=35 // pred_fallthru
        _
    $region36: #{_lambda_.2} parent=5 // pred_fallthru
      _
  $region6: #{_lambda_.2} parent=0 // loop_footer
    %s12 = sadd.s32 1, %s8
  $region7: #{_lambda_.2} parent=0 // loop_footer_branch
    %7 = sbr.rel target = $region3
  $region8: #{_lambda_.2} parent=0 // loop_exit
    _

</llo_original>
